<compile_context>
chip_gen: v6e
topology: v6e:2x2x1
jax: 0.10.0
libtpu: 0.0.40
codegen_flags: <defaults>
</compile_context>

<pallas_src>
import functools

import jax
import jax.numpy as jnp
from jax.experimental import pallas as pl
from jax.experimental.pallas import tpu as pltpu


def _round_up(x, m):
    return ((x + m - 1) // m) * m


def _gelu_tanh(x):
    # Exact tanh-approximation GELU from the PyTorch module (computed on the f32 acc).
    c = jnp.sqrt(jnp.asarray(2.0 / jnp.pi, dtype=x.dtype))
    return 0.5 * x * (1.0 + jnp.tanh(c * (x + 0.044715 * (x * x * x))))


# ---------------------------------------------------------------------------
# Kernels
# ---------------------------------------------------------------------------

def _ffn_resident_kernel(x_ref, w1_ref, b1_ref, w2_ref, b2_ref, o_ref):
    # Whole (padded) hidden dim resident in VMEM: single pass, no accumulator.
    x = x_ref[...].astype(w1_ref.dtype)                       # MXU in weight dtype
    h = jnp.dot(x, w1_ref[...], preferred_element_type=jnp.float32)
    h = h + b1_ref[...].astype(jnp.float32)
    h = _gelu_tanh(h)
    out = jnp.dot(h.astype(w2_ref.dtype), w2_ref[...],
                  preferred_element_type=jnp.float32)
    o_ref[...] = (out + b2_ref[...].astype(jnp.float32)).astype(o_ref.dtype)


def _ffn_htiled_kernel(x_ref, w1_ref, b1_ref, w2_ref, b2_ref, o_ref, acc_ref):
    # Hidden dim tiled on the innermost ("arbitrary") grid axis; f32 VMEM accumulator.
    h_idx = pl.program_id(1)

    @pl.when(h_idx == 0)
    def _():
        # Seed the accumulator with b2 so the finalize step is just a cast.
        acc_ref[...] = jnp.broadcast_to(b2_ref[...].astype(jnp.float32),
                                        acc_ref.shape)

    x = x_ref[...].astype(w1_ref.dtype)                       # MXU in weight dtype
    h = jnp.dot(x, w1_ref[...], preferred_element_type=jnp.float32)
    h = h + b1_ref[...].astype(jnp.float32)
    h = _gelu_tanh(h)
    acc_ref[...] += jnp.dot(h.astype(w2_ref.dtype), w2_ref[...],
                            preferred_element_type=jnp.float32)

    @pl.when(h_idx == pl.num_programs(1) - 1)
    def _():
        o_ref[...] = acc_ref[...].astype(o_ref.dtype)


# ---------------------------------------------------------------------------
# Wrapper
# ---------------------------------------------------------------------------

def _vmem_capacity_bytes():
    try:
        info = pltpu.get_tpu_info()
        cap = getattr(info, "vmem_capacity_bytes", None)
        if cap:
            return int(cap)
    except Exception:
        pass
    return 64 * 1024 * 1024  # conservative default (v7x per-TensorCore VMEM)


def prepare_ffn_params(w1, b1, w2, b2, compute_dtype=None):
    """Pad feature dims to lane-dense multiples of 128 and (optionally) cast.

    Call ONCE at init — keeps per-forward weight padding/casting out of the hot path.
    Weights are stored as [in, out] (transposed PyTorch nn.Linear weight).
    """
    E, H = w1.shape
    Ep = _round_up(E, 128)
    Hp = _round_up(H, 128)
    dt = compute_dtype if compute_dtype is not None else w1.dtype
    w1p = jnp.pad(w1, ((0, Ep - E), (0, Hp - H))).astype(dt)
    b1p = jnp.pad(b1, (0, Hp - H)).reshape(1, Hp).astype(dt)
    w2p = jnp.pad(w2, ((0, Hp - H), (0, Ep - E))).astype(dt)
    b2p = jnp.pad(b2, (0, Ep - E)).reshape(1, Ep).astype(dt)
    return w1p, b1p, w2p, b2p


@functools.partial(jax.jit, static_argnames=("block_m", "block_h"))
def feedforward(x, w1p, b1p, w2p, b2p, *, block_m=512, block_h=512):
    """x: [B, T, E]; padded params from prepare_ffn_params (w1p: [Ep, Hp], ...)."""
    B, T, E = x.shape
    Ep, Hp = w1p.shape
    M = B * T

    x_bytes = x.dtype.itemsize
    w_bytes = w1p.dtype.itemsize
    out_bytes = x.dtype.itemsize

    vmem_cap = _vmem_capacity_bytes()
    vmem_limit = min(int(vmem_cap * 0.85), 100 * 1024 * 1024)   # headroom everywhere
    budget = min(int(vmem_cap * 0.60), vmem_limit - (8 << 20))  # pipeline footprint cap

    def footprint(tm, th, resident):
        in_tiles = (tm * Ep * x_bytes            # x tile
                    + Ep * th * w_bytes          # w1 tile
                    + th * w_bytes               # b1 tile
                    + th * Ep * w_bytes          # w2 tile
                    + Ep * w_bytes)              # b2
        out_tile = tm * Ep * out_bytes
        acc = 0 if resident else tm * Ep * 4
        return 2 * (in_tiles + out_tile) + acc   # double-buffered pipeline

    # --- M tiling: large tiles for weight reuse; >=2 tiles when possible so the
    #     "parallel" axis can shard across v7x's two TensorCores.
    tile_m = min(_round_up(block_m, 16), _round_up(M, 16))
    if M >= 32 and _round_up(M, tile_m) // tile_m < 2:
        tile_m = _round_up((M + 1) // 2, 16)

    # --- hidden tiling: keep weights fully resident when they fit the VMEM budget.
    if footprint(tile_m, Hp, True) <= budget:
        resident = True
        tile_h = Hp
    else:
        resident = False
        n = Hp // 128
        div_tiles = sorted((128 * d for d in range(1, n + 1) if n % d == 0),
                           reverse=True)
        desired = min(_round_up(block_h, 128), Hp)
        tile_h = 128
        for th in div_tiles:
            if th <= desired and footprint(tile_m, th, False) <= budget:
                tile_h = th
                break
        while tile_m > 16 and footprint(tile_m, tile_h, False) > budget:
            tile_m = max(16, _round_up(tile_m // 2, 16))

    Mp = _round_up(M, tile_m)

    x2 = x.reshape(M, E)
    if Mp != M or Ep != E:
        x2 = jnp.pad(x2, ((0, Mp - M), (0, Ep - E)))

    out_shape = jax.ShapeDtypeStruct((Mp, Ep), x.dtype)

    if resident:
        grid_spec = pltpu.PrefetchScalarGridSpec(
            num_scalar_prefetch=0,
            grid=(Mp // tile_m,),
            in_specs=[
                pl.BlockSpec((tile_m, Ep), lambda i: (i, 0)),
                pl.BlockSpec((Ep, Hp), lambda i: (0, 0)),
                pl.BlockSpec((1, Hp), lambda i: (0, 0)),
                pl.BlockSpec((Hp, Ep), lambda i: (0, 0)),
                pl.BlockSpec((1, Ep), lambda i: (0, 0)),
            ],
            out_specs=pl.BlockSpec((tile_m, Ep), lambda i: (i, 0)),
        )
        kernel = _ffn_resident_kernel
        dims = ("parallel",)
    else:
        grid_spec = pltpu.PrefetchScalarGridSpec(
            num_scalar_prefetch=0,
            grid=(Mp // tile_m, Hp // tile_h),
            in_specs=[
                pl.BlockSpec((tile_m, Ep), lambda i, h: (i, 0)),
                pl.BlockSpec((Ep, tile_h), lambda i, h: (0, h)),
                pl.BlockSpec((1, tile_h), lambda i, h: (0, h)),
                pl.BlockSpec((tile_h, Ep), lambda i, h: (h, 0)),
                pl.BlockSpec((1, Ep), lambda i, h: (0, 0)),
            ],
            out_specs=pl.BlockSpec((tile_m, Ep), lambda i, h: (i, 0)),
            scratch_shapes=[pltpu.VMEM((tile_m, Ep), jnp.float32)],
        )
        kernel = _ffn_htiled_kernel
        dims = ("parallel", "arbitrary")

    out = pl.pallas_call(
        kernel,
        out_shape=out_shape,
        grid_spec=grid_spec,
        compiler_params=pltpu.CompilerParams(
            dimension_semantics=dims,
            vmem_limit_bytes=vmem_limit,
        ),
    )(x2, w1p, b1p, w2p, b2p)

    return out[:M, :E].reshape(B, T, E)


def _reference(x, w1, b1, w2, b2):
    h = jnp.einsum("bte,eh->bth", x, w1) + b1
    h = _gelu_tanh(h)
    return jnp.einsum("bth,he->bte", h, w2) + b2


if __name__ == "__main__":
    # cfg = {'emb_dim': 32, 'qkv_bias': True}  -> hidden = 4 * emb = 128
    batch, seq, emb = 2, 8, 32
    hidden = emb * 4

    key = jax.random.PRNGKey(0)
    kx, kw1, kb1, kw2, kb2 = jax.random.split(key, 5)

    x = jax.random.normal(kx, (batch, seq, emb), dtype=jnp.float32)
    # Deterministic synthetic parameters, stored as [in, out] (transposed nn.Linear).
    w1 = jax.random.normal(kw1, (emb, hidden), dtype=jnp.float32) * 0.02
    b1 = jax.random.normal(kb1, (hidden,), dtype=jnp.float32) * 0.02
    w2 = jax.random.normal(kw2, (hidden, emb), dtype=jnp.float32) * 0.02
    b2 = jax.random.normal(kb2, (emb,), dtype=jnp.float32) * 0.02

    # f32 params: exact check against the pure-JAX reference.
    params_f32 = prepare_ffn_params(w1, b1, w2, b2)
    y = feedforward(x, *params_f32)
    jax.block_until_ready(y)

    y_ref = _reference(x, w1, b1, w2, b2)
    assert y.shape == (batch, seq, emb)
    assert jnp.allclose(y, y_ref, atol=1e-5, rtol=1e-5), "f32 mismatch vs reference"

    # bf16 weights: exercises the bf16-MXU fast path (looser tolerance expected).
    params_bf16 = prepare_ffn_params(w1, b1, w2, b2, compute_dtype=jnp.bfloat16)
    y_bf16 = feedforward(x, *params_bf16)
    jax.block_until_ready(y_bf16)
    assert jnp.allclose(y_bf16, y_ref, atol=3e-2, rtol=3e-2), "bf16 mismatch vs reference"

    print("KERNEL_OK")
</pallas_src>

<mosaic_0001>
module attributes {stable_mosaic.version = 11 : i64} {
  func.func @_ffn_resident_kernel(%arg0: i32, %arg1: memref<16x128xf32, #tpu.memory_space<vmem>>, %arg2: memref<128x128xf32, #tpu.memory_space<vmem>>, %arg3: memref<1x128xf32, #tpu.memory_space<vmem>>, %arg4: memref<128x128xf32, #tpu.memory_space<vmem>>, %arg5: memref<1x128xf32, #tpu.memory_space<vmem>>, %arg6: memref<16x128xf32, #tpu.memory_space<vmem>>) attributes {dimension_semantics = [#tpu.dimension_semantics<parallel>], iteration_bounds = array<i64: 1>, scalar_prefetch = 0 : i64, scratch_operands = 0 : i64, tpu.core_type = #tpu.core_type<tc>, window_params = [{transform_indices = @transform_0, window_bounds = array<i64: 16, 128>}, {pipeline_mode = #tpu.pipeline_mode<synchronous>, transform_indices = @transform_1, window_bounds = array<i64: 128, 128>}, {pipeline_mode = #tpu.pipeline_mode<synchronous>, transform_indices = @transform_2, window_bounds = array<i64: 1, 128>}, {pipeline_mode = #tpu.pipeline_mode<synchronous>, transform_indices = @transform_3, window_bounds = array<i64: 128, 128>}, {pipeline_mode = #tpu.pipeline_mode<synchronous>, transform_indices = @transform_4, window_bounds = array<i64: 1, 128>}, {transform_indices = @transform_5, window_bounds = array<i64: 16, 128>}]} {
    %c0 = arith.constant 0 : index
    %c0_0 = arith.constant 0 : index
    %0 = vector.load %arg1[%c0, %c0_0] : memref<16x128xf32, #tpu.memory_space<vmem>>, vector<16x128xf32>
    %c0_1 = arith.constant 0 : index
    %c0_2 = arith.constant 0 : index
    %1 = vector.load %arg2[%c0_1, %c0_2] : memref<128x128xf32, #tpu.memory_space<vmem>>, vector<128x128xf32>
    %cst = arith.constant dense<0.000000e+00> : vector<16x128xf32>
    %2 = tpu.matmul %0, %1, %cst {dimension_numbers = #tpu.dot_dimension_numbers<[1], [0], [0], [1], [0, 0, 1, 1], [], []>} : vector<16x128xf32>, vector<128x128xf32>, vector<16x128xf32> -> vector<16x128xf32>
    %c0_3 = arith.constant 0 : index
    %c0_4 = arith.constant 0 : index
    %3 = vector.load %arg3[%c0_3, %c0_4] : memref<1x128xf32, #tpu.memory_space<vmem>>, vector<1x128xf32>
    %4 = vector.broadcast %3 : vector<1x128xf32> to vector<16x128xf32>
    %5 = arith.addf %2, %4 : vector<16x128xf32>
    %cst_5 = arith.constant 0.636619746 : f32
    %6 = math.sqrt %cst_5 : f32
    %cst_6 = arith.constant 5.000000e-01 : f32
    %7 = vector.broadcast %cst_6 : f32 to vector<16x128xf32>
    %8 = arith.mulf %7, %5 : vector<16x128xf32>
    %9 = arith.mulf %5, %5 : vector<16x128xf32>
    %10 = arith.mulf %9, %5 : vector<16x128xf32>
    %cst_7 = arith.constant 4.471500e-02 : f32
    %11 = vector.broadcast %cst_7 : f32 to vector<16x128xf32>
    %12 = arith.mulf %11, %10 : vector<16x128xf32>
    %13 = arith.addf %5, %12 : vector<16x128xf32>
    %14 = vector.broadcast %6 : f32 to vector<16x128xf32>
    %15 = arith.mulf %14, %13 : vector<16x128xf32>
    %16 = math.tanh %15 : vector<16x128xf32>
    %cst_8 = arith.constant 1.000000e+00 : f32
    %17 = vector.broadcast %cst_8 : f32 to vector<16x128xf32>
    %18 = arith.addf %17, %16 : vector<16x128xf32>
    %19 = arith.mulf %8, %18 : vector<16x128xf32>
    %c0_9 = arith.constant 0 : index
    %c0_10 = arith.constant 0 : index
    %20 = vector.load %arg4[%c0_9, %c0_10] : memref<128x128xf32, #tpu.memory_space<vmem>>, vector<128x128xf32>
    %cst_11 = arith.constant dense<0.000000e+00> : vector<16x128xf32>
    %21 = tpu.matmul %19, %20, %cst_11 {dimension_numbers = #tpu.dot_dimension_numbers<[1], [0], [0], [1], [0, 0, 1, 1], [], []>} : vector<16x128xf32>, vector<128x128xf32>, vector<16x128xf32> -> vector<16x128xf32>
    %c0_12 = arith.constant 0 : index
    %c0_13 = arith.constant 0 : index
    %22 = vector.load %arg5[%c0_12, %c0_13] : memref<1x128xf32, #tpu.memory_space<vmem>>, vector<1x128xf32>
    %23 = vector.broadcast %22 : vector<1x128xf32> to vector<16x128xf32>
    %24 = arith.addf %21, %23 : vector<16x128xf32>
    %c0_14 = arith.constant 0 : index
    %c0_15 = arith.constant 0 : index
    %25 = vector.load %arg6[%c0_14, %c0_15] : memref<16x128xf32, #tpu.memory_space<vmem>>, vector<16x128xf32>
    tpu.vector_store %arg6[%c0_14, %c0_15], %24 {strides = array<i32>} : memref<16x128xf32, #tpu.memory_space<vmem>>, vector<16x128xf32>,
    return
  }
  func.func @transform_0(%arg0: i32) -> (i32, i32) {
    %c0_i32 = arith.constant 0 : i32
    %c0_i32_0 = arith.constant 0 : i32
    return %arg0, %c0_i32 : i32, i32
  }
  func.func @transform_1(%arg0: i32) -> (i32, i32) {
    %c0_i32 = arith.constant 0 : i32
    %c0_i32_0 = arith.constant 0 : i32
    %c0_i32_1 = arith.constant 0 : i32
    return %c0_i32, %c0_i32_0 : i32, i32
  }
  func.func @transform_2(%arg0: i32) -> (i32, i32) {
    %c0_i32 = arith.constant 0 : i32
    %c0_i32_0 = arith.constant 0 : i32
    %c0_i32_1 = arith.constant 0 : i32
    return %c0_i32, %c0_i32_0 : i32, i32
  }
  func.func @transform_3(%arg0: i32) -> (i32, i32) {
    %c0_i32 = arith.constant 0 : i32
    %c0_i32_0 = arith.constant 0 : i32
    %c0_i32_1 = arith.constant 0 : i32
    return %c0_i32, %c0_i32_0 : i32, i32
  }
  func.func @transform_4(%arg0: i32) -> (i32, i32) {
    %c0_i32 = arith.constant 0 : i32
    %c0_i32_0 = arith.constant 0 : i32
    %c0_i32_1 = arith.constant 0 : i32
    return %c0_i32, %c0_i32_0 : i32, i32
  }
  func.func @transform_5(%arg0: i32) -> (i32, i32) {
    %c0_i32 = arith.constant 0 : i32
    %c0_i32_0 = arith.constant 0 : i32
    return %arg0, %c0_i32 : i32, i32
  }
}

</mosaic_0001>

<llo_original>
// kernel: feedforward.1
$region0: #{feedforward.1}
  #allocation0 [shape = 'u32[]', space=smem, size = 0x4, offset = 0x4, fixed_abs, tag = 'smem constant byte address 0x4 - core index']
  #allocation1 [shape = 'u32[144,128]{1,0:T(1,128)}', space=vmem, size = 0x12000, scoped, tag = 'internal scratch']
  %s0 = inlined_call_operand.vmem [shape: f32[16,128], index: 0, kind: input, shape index: {}]
  %s1 = inlined_call_operand.hbm [shape: f32[128,128], index: 1, kind: input, shape index: {}]
  %s2 = inlined_call_operand.vmem [shape: f32[1,128], index: 2, kind: input, shape index: {}]
  %s3 = inlined_call_operand.hbm [shape: f32[128,128], index: 3, kind: input, shape index: {}]
  %s4 = inlined_call_operand.vmem [shape: f32[1,128], index: 4, kind: input, shape index: {}]
  %s5 = inlined_call_operand.vmem [shape: f32[16,128], index: 5, kind: output, shape index: {}]
  %s6 = sld [smem:[#allocation0]]
  $region38: #{feedforward.1} parent=0
    _
  %s8 = ssub.s32 1, %s6
  %s9 = scalar_select 0, %s8, %s6
  $region1: #{feedforward.1} parent=0
    #allocation2 [shape = 'u8[65536]{0}', space=vmem, size = 0x10000, scoped, tag = 'input window, operand 1, single buffered']
    #allocation3 [shape = 's32[1]{0}', space=sflag, size = 0x4, scoped, tag = 'scoped memory for feedforward.1']
    #allocation4 [shape = 'u8[65536]{0}', space=vmem, size = 0x10000, scoped, tag = 'input window, operand 3, single buffered']
    #allocation5 [shape = 's32[1]{0}', space=sflag, size = 0x4, scoped, tag = 'scoped memory for feedforward.1']
    %10 = vsyncpa [#allocation3], 0
    %11 = vsyncpa [#allocation5], 0
    // Predicated region
    $region2: #{feedforward.1} parent=1 // pred_check
      _
    $region3: #{feedforward.1} parent=1 // pred_check_branch
      %13 = sbr.rel (0) target = $region5
    $region4: #{feedforward.1} parent=1 // pred_region
      _
    $region5: #{feedforward.1} parent=1 // pred_fallthru
      _
    // Predicated region
    $region6: #{feedforward.1} parent=1 // pred_check
      _
    $region7: #{feedforward.1} parent=1 // pred_check_branch
      %15 = sbr.rel (0) target = $region9
    $region8: #{feedforward.1} parent=1 // pred_region
      %s17 = ssub.s32 2048, 2048
      %18 = vsyncadd [#allocation3], %s17
      %s19 = sshll.u32 [#allocation2], 4
      %s20 = int_to_ptr.vmem [resolvable:$true] %s19
      %25 = dma.hbm_to_vmem [thread:$0]  %s1, 2048, %s20, [#allocation3], 128, 128, 8
    $region9: #{feedforward.1} parent=1 // pred_fallthru
      _
    // Predicated region
    $region10: #{feedforward.1} parent=1 // pred_check
      _
    $region11: #{feedforward.1} parent=1 // pred_check_branch
      %27 = sbr.rel (0) target = $region13
    $region12: #{feedforward.1} parent=1 // pred_region
      _
    $region13: #{feedforward.1} parent=1 // pred_fallthru
      _
    // Predicated region
    $region14: #{feedforward.1} parent=1 // pred_check
      _
    $region15: #{feedforward.1} parent=1 // pred_check_branch
      %29 = sbr.rel (0) target = $region17
    $region16: #{feedforward.1} parent=1 // pred_region
      %s31 = ssub.s32 2048, 2048
      %32 = vsyncadd [#allocation5], %s31
      %s33 = sshll.u32 [#allocation4], 4
      %s34 = int_to_ptr.vmem [resolvable:$true] %s33
      %39 = dma.hbm_to_vmem [thread:$0]  %s3, 2048, %s34, [#allocation5], 128, 128, 8
    $region17: #{feedforward.1} parent=1 // pred_fallthru
      _
    // Predicated region
    $region18: #{feedforward.1} parent=1 // pred_check
      _
    $region19: #{feedforward.1} parent=1 // pred_check_branch
      %41 = sbr.rel (0) target = $region21
    $region20: #{feedforward.1} parent=1 // pred_region
      _
    $region21: #{feedforward.1} parent=1 // pred_fallthru
      _
    // Predicated region
    $region22: #{feedforward.1} parent=1 // pred_check
      _
    $region23: #{feedforward.1} parent=1 // pred_check_branch
      %43 = sbr.rel (0) target = $region25
    $region24: #{feedforward.1} parent=1 // pred_region
      %44 = dma.done [#allocation3], 2048
    $region25: #{feedforward.1} parent=1 // pred_fallthru
      _
    // Predicated region
    $region26: #{feedforward.1} parent=1 // pred_check
      _
    $region27: #{feedforward.1} parent=1 // pred_check_branch
      %46 = sbr.rel (0) target = $region29
    $region28: #{feedforward.1} parent=1 // pred_region
      %47 = dma.done [#allocation5], 2048
    $region29: #{feedforward.1} parent=1 // pred_fallthru
      _
    %v48 = vld [vmem:[%s0] sm:$0xff]
    %v49 = vld [vmem:[%s0 + $0x8] sm:$0xff]
    %v50 = vld [vmem:[#allocation2] sm:$0xff]
    %v51 = vld [vmem:[#allocation2 + $0x8] sm:$0xff]
    %v52 = vld [vmem:[#allocation2 + $0x10] sm:$0xff]
    %v53 = vld [vmem:[#allocation2 + $0x18] sm:$0xff]
    %v54 = vld [vmem:[#allocation2 + $0x20] sm:$0xff]
    %v55 = vld [vmem:[#allocation2 + $0x28] sm:$0xff]
    %v56 = vld [vmem:[#allocation2 + $0x30] sm:$0xff]
    %v57 = vld [vmem:[#allocation2 + $0x38] sm:$0xff]
    %v58 = vld [vmem:[#allocation2 + $0x40] sm:$0xff]
    %v59 = vld [vmem:[#allocation2 + $0x48] sm:$0xff]
    %v60 = vld [vmem:[#allocation2 + $0x50] sm:$0xff]
    %v61 = vld [vmem:[#allocation2 + $0x58] sm:$0xff]
    %v62 = vld [vmem:[#allocation2 + $0x60] sm:$0xff]
    %v63 = vld [vmem:[#allocation2 + $0x68] sm:$0xff]
    %v64 = vld [vmem:[#allocation2 + $0x70] sm:$0xff]
    %v65 = vld [vmem:[#allocation2 + $0x78] sm:$0xff]
    %v66 = vld [vmem:[%s2] sm:$0x1]
    %v68 = vlaneseq
    %v69 = vshrl.u32 %v68, 7
    %v70 = vsub.s32 0, %v69
    %v71 = vrot.slane %v66, %v70
    %73 = vmatprep.subr.mxu0 0.0
    %74 = vmatpush1.msra.mxu0 %v65
    %75 = vmatprep.subr.mxu0 0.0
    %76 = vmatpush1.msra.mxu0 %v64
    %77 = vmatprep.subr.mxu0 0.0
    %78 = vmatpush1.msra.mxu0 %v63
    %79 = vmatprep.subr.mxu0 0.0
    %80 = vmatpush1.msra.mxu0 %v62
    %81 = vmatprep.subr.mxu0 0.0
    %82 = vmatpush1.msra.mxu0 %v61
    %83 = vmatprep.subr.mxu0 0.0
    %84 = vmatpush1.msra.mxu0 %v60
    %85 = vmatprep.subr.mxu0 0.0
    %86 = vmatpush1.msra.mxu0 %v59
    %87 = vmatprep.subr.mxu0 0.0
    %88 = vmatpush1.msra.mxu0 %v58
    %89 = vmatprep.subr.mxu0 0.0
    %90 = vmatpush1.msra.mxu0 %v57
    %91 = vmatprep.subr.mxu0 0.0
    %92 = vmatpush1.msra.mxu0 %v56
    %93 = vmatprep.subr.mxu0 0.0
    %94 = vmatpush1.msra.mxu0 %v55
    %95 = vmatprep.subr.mxu0 0.0
    %96 = vmatpush1.msra.mxu0 %v54
    %97 = vmatprep.subr.mxu0 0.0
    %98 = vmatpush1.msra.mxu0 %v53
    %99 = vmatprep.subr.mxu0 0.0
    %100 = vmatpush1.msra.mxu0 %v52
    %101 = vmatprep.subr.mxu0 0.0
    %102 = vmatpush1.msra.mxu0 %v51
    %103 = vmatprep.subr.mxu0 0.0
    %104 = vmatpush1.msra.mxu0 %v50
    %105 = vmatprep.subr.mxu0 0.0
    %106 = vmatpush2.msra.mxu0 0.0
    %107 = vmatprep.subr.mxu0 0.0
    %108 = vmatpush2.msra.mxu0 0.0
    %109 = vmatprep.subr.mxu0 0.0
    %110 = vmatpush2.msra.mxu0 0.0
    %111 = vmatprep.subr.mxu0 0.0
    %112 = vmatpush2.msra.mxu0 0.0
    %113 = vmatprep.subr.mxu0 0.0
    %114 = vmatpush2.msra.mxu0 0.0
    %115 = vmatprep.subr.mxu0 0.0
    %116 = vmatpush2.msra.mxu0 0.0
    %117 = vmatprep.subr.mxu0 0.0
    %118 = vmatpush2.msra.mxu0 0.0
    %119 = vmatprep.subr.mxu0 0.0
    %120 = vmatpush2.msra.mxu0 0.0
    %121 = vmatprep.subr.mxu0 0.0
    %122 = vmatpush2.msra.mxu0 0.0
    %123 = vmatprep.subr.mxu0 0.0
    %124 = vmatpush2.msra.mxu0 0.0
    %125 = vmatprep.subr.mxu0 0.0
    %126 = vmatpush2.msra.mxu0 0.0
    %127 = vmatprep.subr.mxu0 0.0
    %128 = vmatpush2.msra.mxu0 0.0
    %129 = vmatprep.subr.mxu0 0.0
    %130 = vmatpush2.msra.mxu0 0.0
    %131 = vmatprep.subr.mxu0 0.0
    %132 = vmatpush2.msra.mxu0 0.0
    %133 = vmatprep.subr.mxu0 0.0
    %134 = vmatpush2.msra.mxu0 0.0
    %135 = vmatprep.subr.mxu0 0.0
    %136 = vmatpush2.msra.mxu0 0.0
    %137 = vmatprep.mubr.f32.mxu0 0.0
    %138 = vmatmul.mubr.f32.gmra.mxu0 %v48
    %v139 = vpop.f32.mrf.mxu0
    %v140 = vadd.f32 %v71, %v139
    %v141 = vpop.f32.mrf.mxu0
    %142 = vmatprep.mubr.f32.mxu0 0.0
    %143 = vmatmul.mubr.f32.gmra.mxu0 %v49
    %v144 = vpop.f32.mrf.mxu0
    %v145 = vadd.f32 %v71, %v144
    %v146 = vpop.f32.mrf.mxu0
    %147 = vdwg.mxu0
    %v148 = vmul.f32 %v140, 0.5
    %v149 = vmul.f32 %v145, 0.5
    %v150 = vmul.f32 %v140, %v140
    %v151 = vmul.f32 %v145, %v145
    %v152 = vmul.f32 %v150, %v140
    %v153 = vmul.f32 %v151, %v145
    %v154 = vmul.f32 %v152, 0.044715
    %v155 = vmul.f32 %v153, 0.044715
    %v156 = vadd.f32 %v140, %v154
    %v157 = vadd.f32 %v145, %v155
    %v158 = vmul.f32 %v156, 0.7978845
    %v159 = vmul.f32 %v157, 0.7978845
    %v160 = vtanh.pop %v158
    %v161 = vtanh.pop %v159
    %v162 = vadd.f32 %v160, 1.0
    %v163 = vadd.f32 %v161, 1.0
    %v164 = vmul.f32 %v148, %v162
    %v165 = vmul.f32 %v149, %v163
    %v166 = vld [vmem:[#allocation4] sm:$0xff]
    %v167 = vld [vmem:[#allocation4 + $0x8] sm:$0xff]
    %v168 = vld [vmem:[#allocation4 + $0x10] sm:$0xff]
    %v169 = vld [vmem:[#allocation4 + $0x18] sm:$0xff]
    %v170 = vld [vmem:[#allocation4 + $0x20] sm:$0xff]
    %v171 = vld [vmem:[#allocation4 + $0x28] sm:$0xff]
    %v172 = vld [vmem:[#allocation4 + $0x30] sm:$0xff]
    %v173 = vld [vmem:[#allocation4 + $0x38] sm:$0xff]
    %v174 = vld [vmem:[#allocation4 + $0x40] sm:$0xff]
    %v175 = vld [vmem:[#allocation4 + $0x48] sm:$0xff]
    %v176 = vld [vmem:[#allocation4 + $0x50] sm:$0xff]
    %v177 = vld [vmem:[#allocation4 + $0x58] sm:$0xff]
    %v178 = vld [vmem:[#allocation4 + $0x60] sm:$0xff]
    %v179 = vld [vmem:[#allocation4 + $0x68] sm:$0xff]
    %v180 = vld [vmem:[#allocation4 + $0x70] sm:$0xff]
    %v181 = vld [vmem:[#allocation4 + $0x78] sm:$0xff]
    %v182 = vld [vmem:[%s4] sm:$0x1]
    %v184 = vlaneseq
    %v185 = vshrl.u32 %v184, 7
    %v186 = vsub.s32 0, %v185
    %v187 = vrot.slane %v182, %v186
    %189 = vmatprep.subr.mxu0 0.0
    %190 = vmatpush1.msra.mxu0 %v181
    %191 = vmatprep.subr.mxu0 0.0
    %192 = vmatpush1.msra.mxu0 %v180
    %193 = vmatprep.subr.mxu0 0.0
    %194 = vmatpush1.msra.mxu0 %v179
    %195 = vmatprep.subr.mxu0 0.0
    %196 = vmatpush1.msra.mxu0 %v178
    %197 = vmatprep.subr.mxu0 0.0
    %198 = vmatpush1.msra.mxu0 %v177
    %199 = vmatprep.subr.mxu0 0.0
    %200 = vmatpush1.msra.mxu0 %v176
    %201 = vmatprep.subr.mxu0 0.0
    %202 = vmatpush1.msra.mxu0 %v175
    %203 = vmatprep.subr.mxu0 0.0
    %204 = vmatpush1.msra.mxu0 %v174
    %205 = vmatprep.subr.mxu0 0.0
    %206 = vmatpush1.msra.mxu0 %v173
    %207 = vmatprep.subr.mxu0 0.0
    %208 = vmatpush1.msra.mxu0 %v172
    %209 = vmatprep.subr.mxu0 0.0
    %210 = vmatpush1.msra.mxu0 %v171
    %211 = vmatprep.subr.mxu0 0.0
    %212 = vmatpush1.msra.mxu0 %v170
    %213 = vmatprep.subr.mxu0 0.0
    %214 = vmatpush1.msra.mxu0 %v169
    %215 = vmatprep.subr.mxu0 0.0
    %216 = vmatpush1.msra.mxu0 %v168
    %217 = vmatprep.subr.mxu0 0.0
    %218 = vmatpush1.msra.mxu0 %v167
    %219 = vmatprep.subr.mxu0 0.0
    %220 = vmatpush1.msra.mxu0 %v166
    %221 = vmatprep.subr.mxu0 0.0
    %222 = vmatpush2.msra.mxu0 0.0
    %223 = vmatprep.subr.mxu0 0.0
    %224 = vmatpush2.msra.mxu0 0.0
    %225 = vmatprep.subr.mxu0 0.0
    %226 = vmatpush2.msra.mxu0 0.0
    %227 = vmatprep.subr.mxu0 0.0
    %228 = vmatpush2.msra.mxu0 0.0
    %229 = vmatprep.subr.mxu0 0.0
    %230 = vmatpush2.msra.mxu0 0.0
    %231 = vmatprep.subr.mxu0 0.0
    %232 = vmatpush2.msra.mxu0 0.0
    %233 = vmatprep.subr.mxu0 0.0
    %234 = vmatpush2.msra.mxu0 0.0
    %235 = vmatprep.subr.mxu0 0.0
    %236 = vmatpush2.msra.mxu0 0.0
    %237 = vmatprep.subr.mxu0 0.0
    %238 = vmatpush2.msra.mxu0 0.0
    %239 = vmatprep.subr.mxu0 0.0
    %240 = vmatpush2.msra.mxu0 0.0
    %241 = vmatprep.subr.mxu0 0.0
    %242 = vmatpush2.msra.mxu0 0.0
    %243 = vmatprep.subr.mxu0 0.0
    %244 = vmatpush2.msra.mxu0 0.0
    %245 = vmatprep.subr.mxu0 0.0
    %246 = vmatpush2.msra.mxu0 0.0
    %247 = vmatprep.subr.mxu0 0.0
    %248 = vmatpush2.msra.mxu0 0.0
    %249 = vmatprep.subr.mxu0 0.0
    %250 = vmatpush2.msra.mxu0 0.0
    %251 = vmatprep.subr.mxu0 0.0
    %252 = vmatpush2.msra.mxu0 0.0
    %253 = vmatprep.mubr.f32.mxu0 0.0
    %254 = vmatmul.mubr.f32.gmra.mxu0 %v164
    %v255 = vpop.f32.mrf.mxu0
    %v256 = vadd.f32 %v187, %v255
    %v257 = vpop.f32.mrf.mxu0
    %258 = vmatprep.mubr.f32.mxu0 0.0
    %259 = vmatmul.mubr.f32.gmra.mxu0 %v165
    %v260 = vpop.f32.mrf.mxu0
    %v261 = vadd.f32 %v187, %v260
    %v262 = vpop.f32.mrf.mxu0
    %263 = vdwg.mxu0
    %264 = vst [vmem:[%s5] sm:$0xff] %v256
    %265 = vst [vmem:[%s5 + $0x8] sm:$0xff] %v261
    // Predicated region
    $region30: #{feedforward.1} parent=1 // pred_check
      _
    $region31: #{feedforward.1} parent=1 // pred_check_branch
      %267 = sbr.rel (0) target = $region33
    $region32: #{feedforward.1} parent=1 // pred_region
      _
    $region33: #{feedforward.1} parent=1 // pred_fallthru
      _
    // Predicated region
    $region34: #{feedforward.1} parent=1 // pred_check
      _
    $region35: #{feedforward.1} parent=1 // pred_check_branch
      %269 = sbr.rel (0) target = $region37
    $region36: #{feedforward.1} parent=1 // pred_region
      _
    $region37: #{feedforward.1} parent=1 // pred_fallthru
      _
    %270 = vsyncpa [#allocation3], 1
    %271 = vsyncpa [#allocation5], 1

</llo_original>
